<compile_context>
chip_gen: v7x
topology: tpu7x:2x2x1
jax: 0.10.0
libtpu: 0.0.40
codegen_flags: <defaults>
</compile_context>

<pallas_src>
import math

import jax
import jax.numpy as jnp
from jax import lax
from jax.experimental import pallas as pl
from jax.experimental.pallas import tpu as pltpu


def _round_up(x: int, m: int) -> int:
    return ((x + m - 1) // m) * m


def _cdiv(a: int, b: int) -> int:
    return (a + b - 1) // b


def _split(total: int, target: int, align: int):
    """Split `total` (a multiple of `align`) into n near-equal tiles, each a
    multiple of `align` and roughly <= max(target, align). Returns (tile, n)."""
    n = max(1, _cdiv(total, max(target, align)))
    tile = _round_up(_cdiv(total, n), align)
    n = _cdiv(total, tile)
    return tile, n


def linear_kernel(x_ref, w_ref, o_ref, acc_ref):
    # x_ref:  (tm, tk)  activation tile (flattened leading dims x K-slice)
    # w_ref:  (tn, tk)  weight tile in native (d_out, d_in) layout
    # o_ref:  (tm, tn)  output tile (resident across the K axis)
    # acc_ref:(tm, tn)  f32 accumulator scratch
    k = pl.program_id(2)

    @pl.when(k == 0)
    def _():
        acc_ref[...] = jnp.zeros_like(acc_ref)

    # Contract x's last dim with W's last dim (d_in): (tm,tk) x (tn,tk) -> (tm,tn).
    # RHS-transposed contraction is MXU-native (no per-tile XLU transpose emitted),
    # so we keep W in its native layout and avoid a weight-transpose HBM copy.
    acc_ref[...] += lax.dot_general(
        x_ref[...],
        w_ref[...],
        dimension_numbers=(((1,), (1,)), ((), ())),
        preferred_element_type=jnp.float32,
    )

    @pl.when(k == pl.num_programs(2) - 1)
    def _():
        o_ref[...] = acc_ref[...].astype(o_ref.dtype)


def linear(x: jax.Array, weight: jax.Array, *,
           compute_dtype=jnp.bfloat16,
           tm: int = 512, tn: int = 512, tk: int | None = None,
           vmem_budget_bytes: int = 24 * 1024 * 1024) -> jax.Array:
    """x: (..., d_in), weight: (d_out, d_in) -> (..., d_out).

    compute_dtype: operand dtype fed to the MXU (f32 accumulation is always kept).
    Pass None to keep the input dtype (strict f32 numerics, slower MXU path).
    """
    d_out, d_in = weight.shape
    lead = x.shape[:-1]
    M = math.prod(lead) if lead else 1
    out_dtype = x.dtype

    if compute_dtype is None:
        compute_dtype = x.dtype
    cdt = jnp.dtype(compute_dtype)
    itm = cdt.itemsize
    oitm = jnp.dtype(out_dtype).itemsize

    # In a real model, cast W to bf16 once at init rather than per call.
    x2 = x.reshape(M, d_in).astype(cdt)
    w = weight.astype(cdt)

    if tk is None:
        tk = 2048 if itm <= 2 else 1024

    M8 = _round_up(M, 8)
    N128 = _round_up(d_out, 128)
    K128 = _round_up(d_in, 128)

    # Small-M ("decode") path: pure weight-streaming problem. Clamp tm to the row
    # count, widen N/K tiles so few, large steps amortize per-step overhead.
    if M8 <= 256:
        tm = M8
        tn = max(tn, 512)
        tk = max(tk, 4096 if itm <= 2 else 2048)

    tm_e, nm = _split(M8, tm, 8)
    tn_e, nn = _split(N128, tn, 128)

    # v7x megacore: make sure at least one "parallel" grid axis has >= 2 blocks
    # when the problem allows it, so both TensorCores get work.
    if nm == 1 and nn == 1 and N128 >= 256:
        tn_e, nn = _split(N128, _round_up(_cdiv(N128, 2), 128), 128)

    # K tile: as large as the VMEM budget allows (double-buffered x / W tiles,
    # double-buffered output tile, f32 accumulator scratch).
    def _footprint(tk_cand: int) -> int:
        return (2 * (tm_e + tn_e) * tk_cand * itm
                + 2 * tm_e * tn_e * oitm
                + tm_e * tn_e * 4)

    tk_e, nk = _split(K128, tk, 128)
    while _footprint(tk_e) > vmem_budget_bytes and tk_e > 128:
        tk_e, nk = _split(K128, max(128, tk_e // 2), 128)

    Mp, Np, Kp = nm * tm_e, nn * tn_e, nk * tk_e

    # Pad only when needed (common 128-multiple model dims take the no-copy path).
    if (Mp, Kp) != (M, d_in):
        x2 = jnp.pad(x2, ((0, Mp - M), (0, Kp - d_in)))
    if (Np, Kp) != (d_out, d_in):
        w = jnp.pad(w, ((0, Np - d_out), (0, Kp - d_in)))

    # Advisory cost: include tile re-reads (x read once per N block, W per M block).
    cost = pl.CostEstimate(
        flops=2 * Mp * Kp * Np,
        transcendentals=0,
        bytes_accessed=(Mp * Kp * itm * nn
                        + Np * Kp * itm * nm
                        + Mp * Np * oitm),
    )

    out = pl.pallas_call(
        linear_kernel,
        out_shape=jax.ShapeDtypeStruct((Mp, Np), out_dtype),
        grid_spec=pltpu.PrefetchScalarGridSpec(
            num_scalar_prefetch=0,
            grid=(nm, nn, nk),
            in_specs=[
                # activation tile: (tm, tk)
                pl.BlockSpec((tm_e, tk_e), lambda i, j, k: (i, k)),
                # weight tile in native (d_out, d_in) layout: (tn, tk)
                pl.BlockSpec((tn_e, tk_e), lambda i, j, k: (j, k)),
            ],
            out_specs=pl.BlockSpec((tm_e, tn_e), lambda i, j, k: (i, j)),
            scratch_shapes=[pltpu.VMEM((tm_e, tn_e), jnp.float32)],
        ),
        compiler_params=pltpu.CompilerParams(
            dimension_semantics=("parallel", "parallel", "arbitrary"),
            vmem_limit_bytes=32 * 1024 * 1024,
        ),
        cost_estimate=cost,
    )(x2, w)

    if (Mp, Np) != (M, d_out):
        out = out[:M, :d_out]
    return out.reshape(*lead, d_out)


def init_linear_weight(key, in_features: int, out_features: int, dtype=jnp.float32):
    """Deterministic trunc-normal init matching Linear.reset_parameters."""
    std = math.sqrt(2.0 / (in_features + out_features))
    w = jax.random.truncated_normal(
        key, lower=-3.0, upper=3.0, shape=(out_features, in_features),
        dtype=jnp.float32,
    ) * std
    return w.astype(dtype)


if __name__ == "__main__":
    key = jax.random.PRNGKey(0)
    k_w, k_x = jax.random.split(key)

    batch, seq = 2, 8
    in_features, out_features = 32, 64

    weight = init_linear_weight(k_w, in_features, out_features)          # (d_out, d_in)
    x = jax.random.normal(k_x, (batch, seq, in_features), jnp.float32)   # (..., d_in)

    y_ref = jnp.einsum("bsd,od->bso", x, weight)

    # Default (bf16 operands, f32 accumulation) — loosened tolerance vs f32 ref.
    y = jax.block_until_ready(linear(x, weight))
    assert y.shape == (batch, seq, out_features)
    assert y.dtype == x.dtype
    assert jnp.allclose(y, y_ref, atol=3e-2, rtol=3e-2), "mismatch (bf16 path)"

    # Strict f32 operand path — tight tolerance.
    y32 = jax.block_until_ready(linear(x, weight, compute_dtype=None))
    assert jnp.allclose(y32, y_ref, atol=1e-5, rtol=1e-5), "mismatch (f32 path)"

    # Unaligned shape (M not a multiple of 8) exercises the ragged/pad path.
    x2 = jax.random.normal(jax.random.PRNGKey(1), (3, in_features), jnp.float32)
    y2 = jax.block_until_ready(linear(x2, weight))
    assert jnp.allclose(y2, x2 @ weight.T, atol=3e-2, rtol=3e-2), "mismatch (unaligned)"

    print("KERNEL_OK")
</pallas_src>

<mosaic_0001>
module attributes {stable_mosaic.version = 11 : i64} {
  func.func @linear_kernel(%arg0: i32, %arg1: i32, %arg2: i32, %arg3: memref<16x128xbf16, #tpu.memory_space<vmem>>, %arg4: memref<128x128xbf16, #tpu.memory_space<vmem>>, %arg5: memref<16x128xf32, #tpu.memory_space<vmem>>, %arg6: memref<16x128xf32, #tpu.memory_space<vmem>>) attributes {dimension_semantics = [#tpu.dimension_semantics<parallel>, #tpu.dimension_semantics<parallel>, #tpu.dimension_semantics<arbitrary>], iteration_bounds = array<i64: 1, 1, 1>, scalar_prefetch = 0 : i64, scratch_operands = 1 : i64, tpu.core_type = #tpu.core_type<tc>, window_params = [{transform_indices = @transform_0, window_bounds = array<i64: 16, 128>}, {transform_indices = @transform_1, window_bounds = array<i64: 128, 128>}, {transform_indices = @transform_2, window_bounds = array<i64: 16, 128>}]} {
    %c0_i32 = arith.constant 0 : i32
    %0 = arith.cmpi eq, %arg2, %c0_i32 : i32
    %1 = arith.extui %0 : i1 to i32
    %c0_i32_0 = arith.constant 0 : i32
    %2 = arith.cmpi ne, %1, %c0_i32_0 : i32
    scf.if %2 {
      %cst_10 = arith.constant 0.000000e+00 : f32
      %12 = vector.broadcast %cst_10 : f32 to vector<16x128xf32>
      %c0_11 = arith.constant 0 : index
      %c0_12 = arith.constant 0 : index
      %13 = vector.load %arg6[%c0_11, %c0_12] : memref<16x128xf32, #tpu.memory_space<vmem>>, vector<16x128xf32>
      tpu.vector_store %arg6[%c0_11, %c0_12], %12 {strides = array<i32>} : memref<16x128xf32, #tpu.memory_space<vmem>>, vector<16x128xf32>,
    } else {
    }
    %c0 = arith.constant 0 : index
    %c0_1 = arith.constant 0 : index
    %3 = vector.load %arg6[%c0, %c0_1] : memref<16x128xf32, #tpu.memory_space<vmem>>, vector<16x128xf32>
    %c0_2 = arith.constant 0 : index
    %c0_3 = arith.constant 0 : index
    %4 = vector.load %arg3[%c0_2, %c0_3] : memref<16x128xbf16, #tpu.memory_space<vmem>>, vector<16x128xbf16>
    %c0_4 = arith.constant 0 : index
    %c0_5 = arith.constant 0 : index
    %5 = vector.load %arg4[%c0_4, %c0_5] : memref<128x128xbf16, #tpu.memory_space<vmem>>, vector<128x128xbf16>
    %cst = arith.constant dense<0.000000e+00> : vector<16x128xf32>
    %6 = tpu.matmul %4, %5, %cst {dimension_numbers = #tpu.dot_dimension_numbers<[1], [1], [0], [0], [0, 0, 1, 0], [], []>} : vector<16x128xbf16>, vector<128x128xbf16>, vector<16x128xf32> -> vector<16x128xf32>
    %7 = arith.addf %3, %6 : vector<16x128xf32>
    %c0_6 = arith.constant 0 : index
    %c0_7 = arith.constant 0 : index
    %8 = vector.load %arg6[%c0_6, %c0_7] : memref<16x128xf32, #tpu.memory_space<vmem>>, vector<16x128xf32>
    tpu.vector_store %arg6[%c0_6, %c0_7], %7 {strides = array<i32>} : memref<16x128xf32, #tpu.memory_space<vmem>>, vector<16x128xf32>,
    %c0_i32_8 = arith.constant 0 : i32
    %9 = arith.cmpi eq, %arg2, %c0_i32_8 : i32
    %10 = arith.extui %9 : i1 to i32
    %c0_i32_9 = arith.constant 0 : i32
    %11 = arith.cmpi ne, %10, %c0_i32_9 : i32
    scf.if %11 {
      %c0_10 = arith.constant 0 : index
      %c0_11 = arith.constant 0 : index
      %12 = vector.load %arg6[%c0_10, %c0_11] : memref<16x128xf32, #tpu.memory_space<vmem>>, vector<16x128xf32>
      %c0_12 = arith.constant 0 : index
      %c0_13 = arith.constant 0 : index
      %13 = vector.load %arg5[%c0_12, %c0_13] : memref<16x128xf32, #tpu.memory_space<vmem>>, vector<16x128xf32>
      tpu.vector_store %arg5[%c0_12, %c0_13], %12 {strides = array<i32>} : memref<16x128xf32, #tpu.memory_space<vmem>>, vector<16x128xf32>,
    } else {
    }
    return
  }
  func.func @transform_0(%arg0: i32, %arg1: i32, %arg2: i32) -> (i32, i32) {
    %c0_i32 = arith.constant 0 : i32
    return %arg0, %arg2 : i32, i32
  }
  func.func @transform_1(%arg0: i32, %arg1: i32, %arg2: i32) -> (i32, i32) {
    %c0_i32 = arith.constant 0 : i32
    return %arg1, %arg2 : i32, i32
  }
  func.func @transform_2(%arg0: i32, %arg1: i32, %arg2: i32) -> (i32, i32) {
    %c0_i32 = arith.constant 0 : i32
    return %arg0, %arg1 : i32, i32
  }
}

</mosaic_0001>

<llo_original>
// kernel: tpu_custom_call.1
$region0: #{tpu_custom_call.1}
  #allocation0 [shape = 'u32[]', space=smem, size = 0x4, offset = 0x4, fixed_abs, tag = 'smem constant byte address 0x4 - core index']
  #allocation1 [shape = 'u32[144,128]{1,0:T(1,128)}', space=vmem, size = 0x12000, scoped, tag = 'internal scratch']
  #allocation2 [shape = 'f32[16,128]{1,0:T(8,128)}', space=vmem, size = 0x2000, scoped, tag = 'scratch operand']
  %s0 = inlined_call_operand.hbm [shape: bf16[16,128], index: 0, kind: input, shape index: {}]
  %s1 = inlined_call_operand.hbm [shape: bf16[128,128], index: 1, kind: input, shape index: {}]
  %s2 = inlined_call_operand.hbm [shape: f32[16,128], index: 2, kind: output, shape index: {}]
  %s3 = sld [smem:[#allocation0]]
  $region34: #{tpu_custom_call.1} parent=0
    _
  %s5 = ssub.s32 1, %s3
  %s6 = scalar_select 0, %s5, %s3
  $region1: #{tpu_custom_call.1} parent=0
    #allocation3 [shape = 'u8[4096]{0}', space=vmem, size = 0x1000, scoped, tag = 'input window, operand 0, single buffered']
    #allocation4 [shape = 's32[1]{0}', space=sflag, size = 0x4, scoped, tag = 'scoped memory for tpu_custom_call.1']
    #allocation5 [shape = 's32[1]{0}', space=sflag, size = 0x4, scoped, tag = 'scoped memory for tpu_custom_call.1']
    #allocation6 [shape = 'u8[32768]{0}', space=vmem, size = 0x8000, scoped, tag = 'input window, operand 1, single buffered']
    #allocation7 [shape = 's32[1]{0}', space=sflag, size = 0x4, scoped, tag = 'scoped memory for tpu_custom_call.1']
    #allocation8 [shape = 'u8[8192]{0}', space=vmem, size = 0x2000, scoped, tag = 'output window, operand 0, single buffered']
    %7 = vsyncpa [#allocation4], 0
    %8 = vsyncpa [#allocation7], 0
    %9 = vsyncpa [#allocation5], 0
    // Predicated region
    $region2: #{tpu_custom_call.1} parent=1 // pred_check
      _
    $region3: #{tpu_custom_call.1} parent=1 // pred_check_branch
      %11 = sbr.rel (0) target = $region5
    $region4: #{tpu_custom_call.1} parent=1 // pred_region
      %s13 = ssub.s32 128, 128
      %14 = vsyncadd [#allocation4], %s13
      %s15 = sshll.u32 [#allocation3], 4
      %s16 = int_to_ptr.vmem [resolvable:$true] %s15
      %21 = dma.hbm_to_vmem [thread:$0]  %s0, 128, %s16, [#allocation4], 64, 64, 4
    $region5: #{tpu_custom_call.1} parent=1 // pred_fallthru
      _
    // Predicated region
    $region6: #{tpu_custom_call.1} parent=1 // pred_check
      _
    $region7: #{tpu_custom_call.1} parent=1 // pred_check_branch
      %23 = sbr.rel (0) target = $region9
    $region8: #{tpu_custom_call.1} parent=1 // pred_region
      %s25 = ssub.s32 1024, 1024
      %26 = vsyncadd [#allocation7], %s25
      %s27 = sshll.u32 [#allocation6], 4
      %s28 = int_to_ptr.vmem [resolvable:$true] %s27
      %33 = dma.hbm_to_vmem [thread:$0]  %s1, 1024, %s28, [#allocation7], 64, 64, 4
    $region9: #{tpu_custom_call.1} parent=1 // pred_fallthru
      _
    // Predicated region
    $region10: #{tpu_custom_call.1} parent=1 // pred_check
      _
    $region11: #{tpu_custom_call.1} parent=1 // pred_check_branch
      %35 = sbr.rel (0) target = $region13
    $region12: #{tpu_custom_call.1} parent=1 // pred_region
      %36 = dma.done [#allocation4], 128
    $region13: #{tpu_custom_call.1} parent=1 // pred_fallthru
      _
    // Predicated region
    $region14: #{tpu_custom_call.1} parent=1 // pred_check
      _
    $region15: #{tpu_custom_call.1} parent=1 // pred_check_branch
      %38 = sbr.rel (0) target = $region17
    $region16: #{tpu_custom_call.1} parent=1 // pred_region
      %39 = dma.done [#allocation7], 1024
    $region17: #{tpu_custom_call.1} parent=1 // pred_fallthru
      _
    %p41 = scmp.eq.s32.totalorder 0, 0
    // Predicated region
    $region18: #{tpu_custom_call.1} parent=1 // pred_check
      %p42 = pneg %p41
    $region19: #{tpu_custom_call.1} parent=1 // pred_check_branch
      %44 = sbr.rel (%p42) target = $region21
    $region20: #{tpu_custom_call.1} parent=1 // pred_region
      %45 = vst [vmem:[#allocation2] sm:$0xff] 0.0
      %46 = vst [vmem:[#allocation2 + $0x8] sm:$0xff] 0.0
    $region21: #{tpu_custom_call.1} parent=1 // pred_fallthru
      _
    %v47 = vld [vmem:[#allocation2] sm:$0xff]
    %v48 = vld [vmem:[#allocation2 + $0x8] sm:$0xff]
    %v49 = vld [vmem:[#allocation3] sm:$0xf]
    %v50 = vld [vmem:[#allocation3 + $0x4] sm:$0xf]
    %v51 = vld [vmem:[#allocation6] sm:$0xf]
    %v52 = vld [vmem:[#allocation6 + $0x4] sm:$0xf]
    %v53 = vld [vmem:[#allocation6 + $0x8] sm:$0xf]
    %v54 = vld [vmem:[#allocation6 + $0xc] sm:$0xf]
    %v55 = vld [vmem:[#allocation6 + $0x10] sm:$0xf]
    %v56 = vld [vmem:[#allocation6 + $0x14] sm:$0xf]
    %v57 = vld [vmem:[#allocation6 + $0x18] sm:$0xf]
    %v58 = vld [vmem:[#allocation6 + $0x1c] sm:$0xf]
    %v59 = vld [vmem:[#allocation6 + $0x20] sm:$0xf]
    %v60 = vld [vmem:[#allocation6 + $0x24] sm:$0xf]
    %v61 = vld [vmem:[#allocation6 + $0x28] sm:$0xf]
    %v62 = vld [vmem:[#allocation6 + $0x2c] sm:$0xf]
    %v63 = vld [vmem:[#allocation6 + $0x30] sm:$0xf]
    %v64 = vld [vmem:[#allocation6 + $0x34] sm:$0xf]
    %v65 = vld [vmem:[#allocation6 + $0x38] sm:$0xf]
    %v66 = vld [vmem:[#allocation6 + $0x3c] sm:$0xf]
    %v69 = vunpack.c.l.b16 %v49
    %v70 = vunpack.c.l.b16 %v50
    %v71 = vpack.c.b16 %v70, %v69
    %v89 = vunpack.c.l.b16 %v51
    %v90 = vunpack.c.l.b16 %v52
    %v91 = vunpack.c.l.b16 %v53
    %v92 = vunpack.c.l.b16 %v54
    %v93 = vunpack.c.l.b16 %v55
    %v94 = vunpack.c.l.b16 %v56
    %v95 = vunpack.c.l.b16 %v57
    %v96 = vunpack.c.l.b16 %v58
    %v97 = vunpack.c.l.b16 %v59
    %v98 = vunpack.c.l.b16 %v60
    %v99 = vunpack.c.l.b16 %v61
    %v100 = vunpack.c.l.b16 %v62
    %v101 = vunpack.c.l.b16 %v63
    %v102 = vunpack.c.l.b16 %v64
    %v103 = vunpack.c.l.b16 %v65
    %v104 = vunpack.c.l.b16 %v66
    %v105 = vpack.c.b16 %v90, %v89
    %v106 = vpack.c.b16 %v92, %v91
    %v107 = vpack.c.b16 %v94, %v93
    %v108 = vpack.c.b16 %v96, %v95
    %v109 = vpack.c.b16 %v98, %v97
    %v110 = vpack.c.b16 %v100, %v99
    %v111 = vpack.c.b16 %v102, %v101
    %v112 = vpack.c.b16 %v104, %v103
    %121 = vmatprep.subr.bf16.mxu0 0
    %122 = vmatpush1.bf16.xpose.msra.mxu0 %v105
    %123 = vmatprep.subr.bf16.mxu0 0
    %124 = vmatpush1.bf16.xpose.msra.mxu0 %v106
    %125 = vmatprep.subr.bf16.mxu0 0
    %126 = vmatpush1.bf16.xpose.msra.mxu0 %v107
    %127 = vmatprep.subr.bf16.mxu0 0
    %128 = vmatpush1.bf16.xpose.msra.mxu0 %v108
    %129 = vmatprep.subr.bf16.mxu0 0
    %130 = vmatpush1.bf16.xpose.msra.mxu0 %v109
    %131 = vmatprep.subr.bf16.mxu0 0
    %132 = vmatpush1.bf16.xpose.msra.mxu0 %v110
    %133 = vmatprep.subr.bf16.mxu0 0
    %134 = vmatpush1.bf16.xpose.msra.mxu0 %v111
    %135 = vmatprep.subr.bf16.mxu0 0
    %136 = vmatpush1.bf16.xpose.msra.mxu0 %v112
    %137 = vmatprep.subr.bf16.mxu0 0
    %138 = vmatpush1.bf16.xpose.msra.mxu0 0
    %139 = vmatprep.subr.bf16.mxu0 0
    %140 = vmatpush1.bf16.xpose.msra.mxu0 0
    %141 = vmatprep.subr.bf16.mxu0 0
    %142 = vmatpush1.bf16.xpose.msra.mxu0 0
    %143 = vmatprep.subr.bf16.mxu0 0
    %144 = vmatpush1.bf16.xpose.msra.mxu0 0
    %145 = vmatprep.subr.bf16.mxu0 0
    %146 = vmatpush1.bf16.xpose.msra.mxu0 0
    %147 = vmatprep.subr.bf16.mxu0 0
    %148 = vmatpush1.bf16.xpose.msra.mxu0 0
    %149 = vmatprep.subr.bf16.mxu0 0
    %150 = vmatpush1.bf16.xpose.msra.mxu0 0
    %151 = vmatprep.subr.bf16.mxu0 0
    %152 = vmatpush1.bf16.xpose.msra.mxu0 0
    %153 = vmatprep.mubr.bf16.mxu0 0
    %154 = vmatmul.mubr.bf16.gmra.mrb[0].mxu0 %v71
    %v155 = vpop.f32.mrb[0].mxu0
    %v156 = vadd.f32 0.0, %v155
    %v157 = vpop.f32.mrb[0].mxu0
    %v158 = vpop.f32.mrb[0].mxu0
    %v159 = vadd.f32 0.0, %v158
    %v160 = vpop.f32.mrb[0].mxu0
    %161 = vdwg.mxu0
    %v162 = vadd.f32 %v47, %v156
    %v163 = vadd.f32 %v48, %v159
    %164 = vst [vmem:[#allocation2] sm:$0xff] %v162
    %165 = vst [vmem:[#allocation2 + $0x8] sm:$0xff] %v163
    // Predicated region
    $region22: #{tpu_custom_call.1} parent=1 // pred_check
      %p166 = pneg %p41
    $region23: #{tpu_custom_call.1} parent=1 // pred_check_branch
      %168 = sbr.rel (%p166) target = $region25
    $region24: #{tpu_custom_call.1} parent=1 // pred_region
      %v169 = vld [vmem:[#allocation2] sm:$0xff]
      %v170 = vld [vmem:[#allocation2 + $0x8] sm:$0xff]
      %171 = vst [vmem:[#allocation8] sm:$0xff] %v169
      %172 = vst [vmem:[#allocation8 + $0x8] sm:$0xff] %v170
    $region25: #{tpu_custom_call.1} parent=1 // pred_fallthru
      _
    // Predicated region
    $region26: #{tpu_custom_call.1} parent=1 // pred_check
      _
    $region27: #{tpu_custom_call.1} parent=1 // pred_check_branch
      %174 = sbr.rel (0) target = $region29
    $region28: #{tpu_custom_call.1} parent=1 // pred_region
      %s176 = ssub.s32 256, 256
      %177 = vsyncadd [#allocation5], %s176
      %s178 = sshll.u32 [#allocation8], 4
      %s179 = int_to_ptr.vmem [resolvable:$true] %s178
      %184 = dma.vmem_to_hbm [thread:$0]  %s179, 256, %s2, [#allocation5], 128, 128, 8
    $region29: #{tpu_custom_call.1} parent=1 // pred_fallthru
      _
    // Predicated region
    $region30: #{tpu_custom_call.1} parent=1 // pred_check
      _
    $region31: #{tpu_custom_call.1} parent=1 // pred_check_branch
      %186 = sbr.rel (0) target = $region33
    $region32: #{tpu_custom_call.1} parent=1 // pred_region
      %187 = dma.done [#allocation5], 256
    $region33: #{tpu_custom_call.1} parent=1 // pred_fallthru
      _
    %188 = vsyncpa [#allocation4], 1
    %189 = vsyncpa [#allocation7], 1
    %190 = vsyncpa [#allocation5], 1

</llo_original>
